<compile_context>
chip_gen: v6e
topology: v6e:2x2x1
jax: 0.10.0
libtpu: 0.0.40
codegen_flags: <defaults>
</compile_context>

<pallas_src>
import jax
import jax.numpy as jnp
from jax.experimental import pallas as pl
from jax.experimental.pallas import tpu as pltpu

F32 = jnp.float32


def _lane_tile(hw, c, budget_bytes=2 * 1024 * 1024):
    """Largest multiple-of-128 divisor of `hw` whose (c, tile) f32 block fits
    the per-block VMEM budget.  Falls back to the full extent when hw is not
    lane-aligned (a full-extent block is always legal)."""
    if hw % 128 != 0:
        return hw
    max_t = max(128, (budget_bytes // (c * 4)) // 128 * 128)
    t = min(hw, max_t)
    while hw % t != 0:
        t -= 128
    return t


# --------------------------------------------------------------------------
# Kernel 1: global average pool (accumulated as a sum; 1/HW folded into w1).
# --------------------------------------------------------------------------
def _gap_sum_kernel(x_ref, o_ref, acc_ref):
    k = pl.program_id(1)

    @pl.when(k == 0)
    def _():
        acc_ref[...] = jnp.zeros_like(acc_ref)

    acc_ref[...] += jnp.sum(x_ref[...].astype(F32), axis=-1, keepdims=True)

    @pl.when(k == pl.num_programs(1) - 1)
    def _():
        o_ref[...] = acc_ref[...]


# --------------------------------------------------------------------------
# Kernel 2: squeeze/excite MLP, batched over N (one matmul pair total).
# --------------------------------------------------------------------------
def _se_mlp_kernel(p_ref, w1_ref, w2_ref, o_ref):
    h = jnp.dot(p_ref[...], w1_ref[...], preferred_element_type=F32)
    h = jnp.maximum(h, 0.0)
    a = jnp.dot(h, w2_ref[...], preferred_element_type=F32)
    o_ref[...] = jax.nn.sigmoid(a)


# --------------------------------------------------------------------------
# Kernel 3: per-channel scaling of the feature map (broadcast over lanes).
# --------------------------------------------------------------------------
def _scale_kernel(x_ref, a_ref, o_ref):
    o_ref[...] = (x_ref[...].astype(F32) * a_ref[...]).astype(o_ref.dtype)


# --------------------------------------------------------------------------
# Wrapper.
# --------------------------------------------------------------------------
def se_block(x, w1, w2):
    """SEBlock forward.

    x : (N, C, H, W)    (PyTorch NCHW layout)
    w1: (C, C//r)       transposed weight of the first bias-free Linear
    w2: (C//r, C)       transposed weight of the second bias-free Linear

    Returns x * sigmoid(relu(mean_{H,W}(x) @ w1) @ w2)[:, :, None, None].
    """
    N, C, H, W = x.shape
    HW = H * W
    Cr = w1.shape[1]
    x3 = x.reshape(N, C, HW)                     # free reshape, HW on lanes

    hw_t = _lane_tile(HW, C)
    n_k = HW // hw_t

    # --- 1. global pooled sums (N, C, 1) -----------------------------------
    pooled = pl.pallas_call(
        _gap_sum_kernel,
        out_shape=jax.ShapeDtypeStruct((N, C, 1), F32),
        grid_spec=pltpu.PrefetchScalarGridSpec(
            num_scalar_prefetch=0,
            grid=(N, n_k),
            in_specs=[pl.BlockSpec((1, C, hw_t), lambda n, k: (n, 0, k))],
            out_specs=pl.BlockSpec((1, C, 1), lambda n, k: (n, 0, 0)),
            scratch_shapes=[pltpu.VMEM((1, C, 1), F32)],
        ),
        compiler_params=pltpu.CompilerParams(
            dimension_semantics=("parallel", "arbitrary")),
    )(x3)

    # --- 2. SE MLP for all N images at once --------------------------------
    w1_scaled = w1.astype(F32) * (1.0 / HW)      # fold the mean's 1/HW into w1
    att = pl.pallas_call(
        _se_mlp_kernel,
        out_shape=jax.ShapeDtypeStruct((N, C), F32),
        grid_spec=pltpu.PrefetchScalarGridSpec(
            num_scalar_prefetch=0,
            grid=(1,),
            in_specs=[
                pl.BlockSpec((N, C), lambda i: (0, 0)),
                pl.BlockSpec((C, Cr), lambda i: (0, 0)),
                pl.BlockSpec((Cr, C), lambda i: (0, 0)),
            ],
            out_specs=pl.BlockSpec((N, C), lambda i: (0, 0)),
        ),
    )(pooled.reshape(N, C), w1_scaled, w2.astype(F32))

    # --- 3. scale the feature map -------------------------------------------
    out = pl.pallas_call(
        _scale_kernel,
        out_shape=jax.ShapeDtypeStruct((N, C, HW), x.dtype),
        grid_spec=pltpu.PrefetchScalarGridSpec(
            num_scalar_prefetch=0,
            grid=(N, n_k),
            in_specs=[
                pl.BlockSpec((1, C, hw_t), lambda n, k: (n, 0, k)),
                pl.BlockSpec((1, C, 1), lambda n, k: (n, 0, 0)),
            ],
            out_specs=pl.BlockSpec((1, C, hw_t), lambda n, k: (n, 0, k)),
        ),
        compiler_params=pltpu.CompilerParams(
            dimension_semantics=("parallel", "parallel")),
    )(x3, att.reshape(N, C, 1))

    return out.reshape(N, C, H, W)


se_block = jax.jit(se_block)


def _se_block_reference(x, w1, w2):
    """Pure-JAX reference matching the PyTorch SEBlock.forward."""
    y = jnp.mean(x.astype(F32), axis=(2, 3))                 # (N, C)
    y = jnp.maximum(y @ w1.astype(F32), 0.0)
    y = jax.nn.sigmoid(y @ w2.astype(F32))
    return x * y[:, :, None, None].astype(x.dtype)


if __name__ == "__main__":
    # channel=128, reduction=16  (SEBlock needs channel >= reduction)
    N, C, H, W = 2, 128, 16, 16
    reduction = 16
    Cr = C // reduction

    key = jax.random.PRNGKey(0)
    kx, k1, k2 = jax.random.split(key, 3)
    x = jax.random.normal(kx, (N, C, H, W), F32)
    # Transposed weights of the two bias-free nn.Linear layers.
    w1 = jax.random.normal(k1, (C, Cr), F32) * (4.0 / C ** 0.5)
    w2 = jax.random.normal(k2, (Cr, C), F32) * (2.0 / Cr ** 0.5)

    out = jax.block_until_ready(se_block(x, w1, w2))
    ref = _se_block_reference(x, w1, w2)

    assert out.shape == x.shape, out.shape
    assert bool(jnp.all(jnp.isfinite(out)))
    err = float(jnp.max(jnp.abs(out - ref)))
    assert err < 1e-3, f"max abs err {err}"
    print("KERNEL_OK")
</pallas_src>

<mosaic_0001>
module attributes {stable_mosaic.version = 11 : i64} {
  func.func @_gap_sum_kernel(%arg0: i32, %arg1: i32, %arg2: memref<1x128x256xf32, #tpu.memory_space<vmem>>, %arg3: memref<1x128x1xf32, #tpu.memory_space<vmem>>, %arg4: memref<1x128x1xf32, #tpu.memory_space<vmem>>) attributes {dimension_semantics = [#tpu.dimension_semantics<parallel>, #tpu.dimension_semantics<arbitrary>], iteration_bounds = array<i64: 2, 1>, scalar_prefetch = 0 : i64, scratch_operands = 1 : i64, tpu.core_type = #tpu.core_type<tc>, window_params = [{transform_indices = @transform_0, window_bounds = array<i64: 1, 128, 256>}, {transform_indices = @transform_1, window_bounds = array<i64: 1, 128, 1>}]} {
    %c0_i32 = arith.constant 0 : i32
    %0 = arith.cmpi eq, %arg1, %c0_i32 : i32
    %1 = arith.extui %0 : i1 to i32
    %c0_i32_0 = arith.constant 0 : i32
    %2 = arith.cmpi ne, %1, %c0_i32_0 : i32
    scf.if %2 {
      %cst_11 = arith.constant 0.000000e+00 : f32
      %12 = vector.broadcast %cst_11 : f32 to vector<1x128x1xf32>
      %c0_12 = arith.constant 0 : index
      %c0_13 = arith.constant 0 : index
      %c0_14 = arith.constant 0 : index
      %13 = vector.load %arg4[%c0_12, %c0_13, %c0_14] : memref<1x128x1xf32, #tpu.memory_space<vmem>>, vector<1x128x1xf32>
      tpu.vector_store %arg4[%c0_12, %c0_13, %c0_14], %12 {strides = array<i32>} : memref<1x128x1xf32, #tpu.memory_space<vmem>>, vector<1x128x1xf32>,
    } else {
    }
    %c0 = arith.constant 0 : index
    %c0_1 = arith.constant 0 : index
    %c0_2 = arith.constant 0 : index
    %3 = vector.load %arg4[%c0, %c0_1, %c0_2] : memref<1x128x1xf32, #tpu.memory_space<vmem>>, vector<1x128x1xf32>
    %c0_3 = arith.constant 0 : index
    %c0_4 = arith.constant 0 : index
    %c0_5 = arith.constant 0 : index
    %4 = vector.load %arg2[%c0_3, %c0_4, %c0_5] : memref<1x128x256xf32, #tpu.memory_space<vmem>>, vector<1x128x256xf32>
    %cst = arith.constant dense<0.000000e+00> : vector<1x128xf32>
    %5 = vector.multi_reduction <add>, %4, %cst [2] : vector<1x128x256xf32> to vector<1x128xf32>
    %6 = vector.shape_cast %5 : vector<1x128xf32> to vector<1x128x1xf32>
    %7 = arith.addf %3, %6 : vector<1x128x1xf32>
    %c0_6 = arith.constant 0 : index
    %c0_7 = arith.constant 0 : index
    %c0_8 = arith.constant 0 : index
    %8 = vector.load %arg4[%c0_6, %c0_7, %c0_8] : memref<1x128x1xf32, #tpu.memory_space<vmem>>, vector<1x128x1xf32>
    tpu.vector_store %arg4[%c0_6, %c0_7, %c0_8], %7 {strides = array<i32>} : memref<1x128x1xf32, #tpu.memory_space<vmem>>, vector<1x128x1xf32>,
    %c0_i32_9 = arith.constant 0 : i32
    %9 = arith.cmpi eq, %arg1, %c0_i32_9 : i32
    %10 = arith.extui %9 : i1 to i32
    %c0_i32_10 = arith.constant 0 : i32
    %11 = arith.cmpi ne, %10, %c0_i32_10 : i32
    scf.if %11 {
      %c0_11 = arith.constant 0 : index
      %c0_12 = arith.constant 0 : index
      %c0_13 = arith.constant 0 : index
      %12 = vector.load %arg4[%c0_11, %c0_12, %c0_13] : memref<1x128x1xf32, #tpu.memory_space<vmem>>, vector<1x128x1xf32>
      %c0_14 = arith.constant 0 : index
      %c0_15 = arith.constant 0 : index
      %c0_16 = arith.constant 0 : index
      %13 = vector.load %arg3[%c0_14, %c0_15, %c0_16] : memref<1x128x1xf32, #tpu.memory_space<vmem>>, vector<1x128x1xf32>
      tpu.vector_store %arg3[%c0_14, %c0_15, %c0_16], %12 {strides = array<i32>} : memref<1x128x1xf32, #tpu.memory_space<vmem>>, vector<1x128x1xf32>,
    } else {
    }
    return
  }
  func.func @transform_0(%arg0: i32, %arg1: i32) -> (i32, i32, i32) {
    %c0_i32 = arith.constant 0 : i32
    %c0_i32_0 = arith.constant 0 : i32
    return %arg0, %c0_i32, %arg1 : i32, i32, i32
  }
  func.func @transform_1(%arg0: i32, %arg1: i32) -> (i32, i32, i32) {
    %c0_i32 = arith.constant 0 : i32
    %c0_i32_0 = arith.constant 0 : i32
    %c0_i32_1 = arith.constant 0 : i32
    return %arg0, %c0_i32, %c0_i32_0 : i32, i32, i32
  }
}

module attributes {stable_mosaic.version = 11 : i64} {
  func.func @_se_mlp_kernel(%arg0: i32, %arg1: memref<2x128xf32, #tpu.memory_space<vmem>>, %arg2: memref<128x8xf32, #tpu.memory_space<vmem>>, %arg3: memref<8x128xf32, #tpu.memory_space<vmem>>, %arg4: memref<2x128xf32, #tpu.memory_space<vmem>>) attributes {dimension_semantics = [#tpu.dimension_semantics<arbitrary>], iteration_bounds = array<i64: 1>, scalar_prefetch = 0 : i64, scratch_operands = 0 : i64, tpu.core_type = #tpu.core_type<tc>, window_params = [{pipeline_mode = #tpu.pipeline_mode<synchronous>, transform_indices = @transform_0, window_bounds = array<i64: 2, 128>}, {pipeline_mode = #tpu.pipeline_mode<synchronous>, transform_indices = @transform_1, window_bounds = array<i64: 128, 8>}, {pipeline_mode = #tpu.pipeline_mode<synchronous>, transform_indices = @transform_2, window_bounds = array<i64: 8, 128>}, {pipeline_mode = #tpu.pipeline_mode<synchronous>, transform_indices = @transform_3, window_bounds = array<i64: 2, 128>}]} {
    %c0 = arith.constant 0 : index
    %c0_0 = arith.constant 0 : index
    %0 = vector.load %arg1[%c0, %c0_0] : memref<2x128xf32, #tpu.memory_space<vmem>>, vector<2x128xf32>
    %c0_1 = arith.constant 0 : index
    %c0_2 = arith.constant 0 : index
    %1 = vector.load %arg2[%c0_1, %c0_2] : memref<128x8xf32, #tpu.memory_space<vmem>>, vector<128x8xf32>
    %cst = arith.constant dense<0.000000e+00> : vector<2x8xf32>
    %2 = tpu.matmul %0, %1, %cst {dimension_numbers = #tpu.dot_dimension_numbers<[1], [0], [0], [1], [0, 0, 1, 1], [], []>} : vector<2x128xf32>, vector<128x8xf32>, vector<2x8xf32> -> vector<2x8xf32>
    %cst_3 = arith.constant 0.000000e+00 : f32
    %3 = vector.broadcast %cst_3 : f32 to vector<2x8xf32>
    %4 = arith.maximumf %2, %3 : vector<2x8xf32>
    %c0_4 = arith.constant 0 : index
    %c0_5 = arith.constant 0 : index
    %5 = vector.load %arg3[%c0_4, %c0_5] : memref<8x128xf32, #tpu.memory_space<vmem>>, vector<8x128xf32>
    %cst_6 = arith.constant dense<0.000000e+00> : vector<2x128xf32>
    %6 = tpu.matmul %4, %5, %cst_6 {dimension_numbers = #tpu.dot_dimension_numbers<[1], [0], [0], [1], [0, 0, 1, 1], [], []>} : vector<2x8xf32>, vector<8x128xf32>, vector<2x128xf32> -> vector<2x128xf32>
    %7 = arith.negf %6 : vector<2x128xf32>
    %8 = math.exp %7 : vector<2x128xf32>
    %cst_7 = arith.constant 1.000000e+00 : f32
    %9 = vector.broadcast %cst_7 : f32 to vector<2x128xf32>
    %10 = arith.addf %9, %8 : vector<2x128xf32>
    %11 = arith.divf %9, %10 : vector<2x128xf32>
    %c0_8 = arith.constant 0 : index
    %c0_9 = arith.constant 0 : index
    %12 = vector.load %arg4[%c0_8, %c0_9] : memref<2x128xf32, #tpu.memory_space<vmem>>, vector<2x128xf32>
    tpu.vector_store %arg4[%c0_8, %c0_9], %11 {strides = array<i32>} : memref<2x128xf32, #tpu.memory_space<vmem>>, vector<2x128xf32>,
    return
  }
  func.func @transform_0(%arg0: i32) -> (i32, i32) {
    %c0_i32 = arith.constant 0 : i32
    %c0_i32_0 = arith.constant 0 : i32
    %c0_i32_1 = arith.constant 0 : i32
    return %c0_i32, %c0_i32_0 : i32, i32
  }
  func.func @transform_1(%arg0: i32) -> (i32, i32) {
    %c0_i32 = arith.constant 0 : i32
    %c0_i32_0 = arith.constant 0 : i32
    %c0_i32_1 = arith.constant 0 : i32
    return %c0_i32, %c0_i32_0 : i32, i32
  }
  func.func @transform_2(%arg0: i32) -> (i32, i32) {
    %c0_i32 = arith.constant 0 : i32
    %c0_i32_0 = arith.constant 0 : i32
    %c0_i32_1 = arith.constant 0 : i32
    return %c0_i32, %c0_i32_0 : i32, i32
  }
  func.func @transform_3(%arg0: i32) -> (i32, i32) {
    %c0_i32 = arith.constant 0 : i32
    %c0_i32_0 = arith.constant 0 : i32
    %c0_i32_1 = arith.constant 0 : i32
    return %c0_i32, %c0_i32_0 : i32, i32
  }
}

module attributes {stable_mosaic.version = 11 : i64} {
  func.func @_scale_kernel(%arg0: i32, %arg1: i32, %arg2: memref<1x128x256xf32, #tpu.memory_space<vmem>>, %arg3: memref<1x128x1xf32, #tpu.memory_space<vmem>>, %arg4: memref<1x128x256xf32, #tpu.memory_space<vmem>>) attributes {dimension_semantics = [#tpu.dimension_semantics<parallel>, #tpu.dimension_semantics<parallel>], iteration_bounds = array<i64: 2, 1>, scalar_prefetch = 0 : i64, scratch_operands = 0 : i64, tpu.core_type = #tpu.core_type<tc>, window_params = [{transform_indices = @transform_0, window_bounds = array<i64: 1, 128, 256>}, {transform_indices = @transform_1, window_bounds = array<i64: 1, 128, 1>}, {transform_indices = @transform_2, window_bounds = array<i64: 1, 128, 256>}]} {
    %c0 = arith.constant 0 : index
    %c0_0 = arith.constant 0 : index
    %c0_1 = arith.constant 0 : index
    %0 = vector.load %arg2[%c0, %c0_0, %c0_1] : memref<1x128x256xf32, #tpu.memory_space<vmem>>, vector<1x128x256xf32>
    %c0_2 = arith.constant 0 : index
    %c0_3 = arith.constant 0 : index
    %c0_4 = arith.constant 0 : index
    %1 = vector.load %arg3[%c0_2, %c0_3, %c0_4] : memref<1x128x1xf32, #tpu.memory_space<vmem>>, vector<1x128x1xf32>
    %2 = vector.broadcast %1 : vector<1x128x1xf32> to vector<1x128x256xf32>
    %3 = arith.mulf %0, %2 : vector<1x128x256xf32>
    %c0_5 = arith.constant 0 : index
    %c0_6 = arith.constant 0 : index
    %c0_7 = arith.constant 0 : index
    %4 = vector.load %arg4[%c0_5, %c0_6, %c0_7] : memref<1x128x256xf32, #tpu.memory_space<vmem>>, vector<1x128x256xf32>
    tpu.vector_store %arg4[%c0_5, %c0_6, %c0_7], %3 {strides = array<i32>} : memref<1x128x256xf32, #tpu.memory_space<vmem>>, vector<1x128x256xf32>,
    return
  }
  func.func @transform_0(%arg0: i32, %arg1: i32) -> (i32, i32, i32) {
    %c0_i32 = arith.constant 0 : i32
    %c0_i32_0 = arith.constant 0 : i32
    return %arg0, %c0_i32, %arg1 : i32, i32, i32
  }
  func.func @transform_1(%arg0: i32, %arg1: i32) -> (i32, i32, i32) {
    %c0_i32 = arith.constant 0 : i32
    %c0_i32_0 = arith.constant 0 : i32
    %c0_i32_1 = arith.constant 0 : i32
    return %arg0, %c0_i32, %c0_i32_0 : i32, i32, i32
  }
  func.func @transform_2(%arg0: i32, %arg1: i32) -> (i32, i32, i32) {
    %c0_i32 = arith.constant 0 : i32
    %c0_i32_0 = arith.constant 0 : i32
    return %arg0, %c0_i32, %arg1 : i32, i32, i32
  }
}

</mosaic_0001>

<llo_original>
// kernel: se_block.4
$region0: #{se_block.4}
  #allocation0 [shape = 'u32[]', space=smem, size = 0x4, offset = 0x4, fixed_abs, tag = 'smem constant byte address 0x4 - core index']
  #allocation1 [shape = 'u32[144,128]{1,0:T(1,128)}', space=vmem, size = 0x12000, scoped, tag = 'internal scratch']
  %s0 = inlined_call_operand.vmem [shape: f32[2,128], index: 0, kind: input, shape index: {}]
  %s1 = inlined_call_operand.vmem [shape: f32[128,8], index: 1, kind: input, shape index: {}]
  %s2 = inlined_call_operand.vmem [shape: f32[8,128], index: 2, kind: input, shape index: {}]
  %s3 = inlined_call_operand.vmem [shape: f32[2,128], index: 3, kind: output, shape index: {}]
  %s4 = sld [smem:[#allocation0]]
  $region22: #{se_block.4} parent=0
    _
  %s6 = ssub.s32 1, %s4
  %s7 = scalar_select 0, %s6, %s4
  // Predicated region
  $region2: #{se_block.4} parent=0 // pred_check
    _
  $region3: #{se_block.4} parent=0 // pred_check_branch
    %9 = sbr.rel (0) target = $region5
  $region4: #{se_block.4} parent=0 // pred_region
    _
  $region5: #{se_block.4} parent=0 // pred_fallthru
    _
  // Predicated region
  $region6: #{se_block.4} parent=0 // pred_check
    _
  $region7: #{se_block.4} parent=0 // pred_check_branch
    %11 = sbr.rel (0) target = $region9
  $region8: #{se_block.4} parent=0 // pred_region
    _
  $region9: #{se_block.4} parent=0 // pred_fallthru
    _
  // Predicated region
  $region10: #{se_block.4} parent=0 // pred_check
    _
  $region11: #{se_block.4} parent=0 // pred_check_branch
    %13 = sbr.rel (0) target = $region13
  $region12: #{se_block.4} parent=0 // pred_region
    _
  $region13: #{se_block.4} parent=0 // pred_fallthru
    _
  %v14 = vld [vmem:[%s0] sm:$0x3]
  %v15 = vld [vmem:[%s1] sm:$0xff]
  %v16 = vld [vmem:[%s1 + $0x8] sm:$0xff]
  %v17 = vld [vmem:[%s1 + $0x10] sm:$0xff]
  %v18 = vld [vmem:[%s1 + $0x18] sm:$0xff]
  %v19 = vld [vmem:[%s1 + $0x20] sm:$0xff]
  %v20 = vld [vmem:[%s1 + $0x28] sm:$0xff]
  %v21 = vld [vmem:[%s1 + $0x30] sm:$0xff]
  %v22 = vld [vmem:[%s1 + $0x38] sm:$0xff]
  %v23 = vld [vmem:[%s1 + $0x40] sm:$0xff]
  %v24 = vld [vmem:[%s1 + $0x48] sm:$0xff]
  %v25 = vld [vmem:[%s1 + $0x50] sm:$0xff]
  %v26 = vld [vmem:[%s1 + $0x58] sm:$0xff]
  %v27 = vld [vmem:[%s1 + $0x60] sm:$0xff]
  %v28 = vld [vmem:[%s1 + $0x68] sm:$0xff]
  %v29 = vld [vmem:[%s1 + $0x70] sm:$0xff]
  %v30 = vld [vmem:[%s1 + $0x78] sm:$0xff]
  %31 = vmatprep.subr.mxu0 0.0
  %32 = vmatpush1.msra.mxu0 %v30
  %33 = vmatprep.subr.mxu0 0.0
  %34 = vmatpush1.msra.mxu0 %v29
  %35 = vmatprep.subr.mxu0 0.0
  %36 = vmatpush1.msra.mxu0 %v28
  %37 = vmatprep.subr.mxu0 0.0
  %38 = vmatpush1.msra.mxu0 %v27
  %39 = vmatprep.subr.mxu0 0.0
  %40 = vmatpush1.msra.mxu0 %v26
  %41 = vmatprep.subr.mxu0 0.0
  %42 = vmatpush1.msra.mxu0 %v25
  %43 = vmatprep.subr.mxu0 0.0
  %44 = vmatpush1.msra.mxu0 %v24
  %45 = vmatprep.subr.mxu0 0.0
  %46 = vmatpush1.msra.mxu0 %v23
  %47 = vmatprep.subr.mxu0 0.0
  %48 = vmatpush1.msra.mxu0 %v22
  %49 = vmatprep.subr.mxu0 0.0
  %50 = vmatpush1.msra.mxu0 %v21
  %51 = vmatprep.subr.mxu0 0.0
  %52 = vmatpush1.msra.mxu0 %v20
  %53 = vmatprep.subr.mxu0 0.0
  %54 = vmatpush1.msra.mxu0 %v19
  %55 = vmatprep.subr.mxu0 0.0
  %56 = vmatpush1.msra.mxu0 %v18
  %57 = vmatprep.subr.mxu0 0.0
  %58 = vmatpush1.msra.mxu0 %v17
  %59 = vmatprep.subr.mxu0 0.0
  %60 = vmatpush1.msra.mxu0 %v16
  %61 = vmatprep.subr.mxu0 0.0
  %62 = vmatpush1.msra.mxu0 %v15
  %63 = vmatprep.subr.mxu0 0.0
  %64 = vmatpush2.msra.mxu0 0.0
  %65 = vmatprep.subr.mxu0 0.0
  %66 = vmatpush2.msra.mxu0 0.0
  %67 = vmatprep.subr.mxu0 0.0
  %68 = vmatpush2.msra.mxu0 0.0
  %69 = vmatprep.subr.mxu0 0.0
  %70 = vmatpush2.msra.mxu0 0.0
  %71 = vmatprep.subr.mxu0 0.0
  %72 = vmatpush2.msra.mxu0 0.0
  %73 = vmatprep.subr.mxu0 0.0
  %74 = vmatpush2.msra.mxu0 0.0
  %75 = vmatprep.subr.mxu0 0.0
  %76 = vmatpush2.msra.mxu0 0.0
  %77 = vmatprep.subr.mxu0 0.0
  %78 = vmatpush2.msra.mxu0 0.0
  %79 = vmatprep.subr.mxu0 0.0
  %80 = vmatpush2.msra.mxu0 0.0
  %81 = vmatprep.subr.mxu0 0.0
  %82 = vmatpush2.msra.mxu0 0.0
  %83 = vmatprep.subr.mxu0 0.0
  %84 = vmatpush2.msra.mxu0 0.0
  %85 = vmatprep.subr.mxu0 0.0
  %86 = vmatpush2.msra.mxu0 0.0
  %87 = vmatprep.subr.mxu0 0.0
  %88 = vmatpush2.msra.mxu0 0.0
  %89 = vmatprep.subr.mxu0 0.0
  %90 = vmatpush2.msra.mxu0 0.0
  %91 = vmatprep.subr.mxu0 0.0
  %92 = vmatpush2.msra.mxu0 0.0
  %93 = vmatprep.subr.mxu0 0.0
  %94 = vmatpush2.msra.mxu0 0.0
  %95 = vmatprep.mubr.f32.mxu0 0.0
  %96 = vmatmul.mubr.f32.gmra.mxu0 %v14
  %v97 = vpop.f32.mrf.mxu0
  %v98 = vadd.f32 0.0, %v97
  %v99 = vpop.f32.mrf.mxu0
  %100 = vdwg.mxu0
  %v101 = vmax.f32 %v98, 0.0
  %v102 = vld [vmem:[%s2] sm:$0xff]
  %vm103 = vcmask 64512
  %v105 = vsel %vm103, %v101, 0
  %107 = vmatprep.subr.mxu0 0.0
  %108 = vmatpush1.msra.mxu0 0.0
  %109 = vmatprep.subr.mxu0 0.0
  %110 = vmatpush1.msra.mxu0 0.0
  %111 = vmatprep.subr.mxu0 0.0
  %112 = vmatpush1.msra.mxu0 0.0
  %113 = vmatprep.subr.mxu0 0.0
  %114 = vmatpush1.msra.mxu0 0.0
  %115 = vmatprep.subr.mxu0 0.0
  %116 = vmatpush1.msra.mxu0 0.0
  %117 = vmatprep.subr.mxu0 0.0
  %118 = vmatpush1.msra.mxu0 0.0
  %119 = vmatprep.subr.mxu0 0.0
  %120 = vmatpush1.msra.mxu0 0.0
  %121 = vmatprep.subr.mxu0 0.0
  %122 = vmatpush1.msra.mxu0 0.0
  %123 = vmatprep.subr.mxu0 0.0
  %124 = vmatpush1.msra.mxu0 0.0
  %125 = vmatprep.subr.mxu0 0.0
  %126 = vmatpush1.msra.mxu0 0.0
  %127 = vmatprep.subr.mxu0 0.0
  %128 = vmatpush1.msra.mxu0 0.0
  %129 = vmatprep.subr.mxu0 0.0
  %130 = vmatpush1.msra.mxu0 0.0
  %131 = vmatprep.subr.mxu0 0.0
  %132 = vmatpush1.msra.mxu0 0.0
  %133 = vmatprep.subr.mxu0 0.0
  %134 = vmatpush1.msra.mxu0 0.0
  %135 = vmatprep.subr.mxu0 0.0
  %136 = vmatpush1.msra.mxu0 0.0
  %137 = vmatprep.subr.mxu0 0.0
  %138 = vmatpush1.msra.mxu0 %v102
  %139 = vmatprep.subr.mxu0 0.0
  %140 = vmatpush2.msra.mxu0 0.0
  %141 = vmatprep.subr.mxu0 0.0
  %142 = vmatpush2.msra.mxu0 0.0
  %143 = vmatprep.subr.mxu0 0.0
  %144 = vmatpush2.msra.mxu0 0.0
  %145 = vmatprep.subr.mxu0 0.0
  %146 = vmatpush2.msra.mxu0 0.0
  %147 = vmatprep.subr.mxu0 0.0
  %148 = vmatpush2.msra.mxu0 0.0
  %149 = vmatprep.subr.mxu0 0.0
  %150 = vmatpush2.msra.mxu0 0.0
  %151 = vmatprep.subr.mxu0 0.0
  %152 = vmatpush2.msra.mxu0 0.0
  %153 = vmatprep.subr.mxu0 0.0
  %154 = vmatpush2.msra.mxu0 0.0
  %155 = vmatprep.subr.mxu0 0.0
  %156 = vmatpush2.msra.mxu0 0.0
  %157 = vmatprep.subr.mxu0 0.0
  %158 = vmatpush2.msra.mxu0 0.0
  %159 = vmatprep.subr.mxu0 0.0
  %160 = vmatpush2.msra.mxu0 0.0
  %161 = vmatprep.subr.mxu0 0.0
  %162 = vmatpush2.msra.mxu0 0.0
  %163 = vmatprep.subr.mxu0 0.0
  %164 = vmatpush2.msra.mxu0 0.0
  %165 = vmatprep.subr.mxu0 0.0
  %166 = vmatpush2.msra.mxu0 0.0
  %167 = vmatprep.subr.mxu0 0.0
  %168 = vmatpush2.msra.mxu0 0.0
  %169 = vmatprep.subr.mxu0 0.0
  %170 = vmatpush2.msra.mxu0 0.0
  %171 = vmatprep.mubr.f32.mxu0 0.0
  %172 = vmatmul.mubr.f32.gmra.mxu0 %v105
  %v173 = vpop.f32.mrf.mxu0
  %v174 = vadd.f32 0.0, %v173
  %v175 = vpop.f32.mrf.mxu0
  %176 = vdwg.mxu0
  %v177 = vxor.u32 %v174, 2147483648
  %v178 = vmul.f32 %v177, 1.442695
  %v179 = vpow.pop %v178
  %v180 = vadd.f32 %v179, 1.0
  %v181 = vrcp.pop %v180
  %v182 = vmul.f32 1.0, %v181
  %183 = vst [vmem:[%s3] sm:$0x3] %v182
  // Predicated region
  $region14: #{se_block.4} parent=0 // pred_check
    _
  $region15: #{se_block.4} parent=0 // pred_check_branch
    %185 = sbr.rel (0) target = $region17
  $region16: #{se_block.4} parent=0 // pred_region
    _
  $region17: #{se_block.4} parent=0 // pred_fallthru
    _
  // Predicated region
  $region18: #{se_block.4} parent=0 // pred_check
    _
  $region19: #{se_block.4} parent=0 // pred_check_branch
    %187 = sbr.rel (0) target = $region21
  $region20: #{se_block.4} parent=0 // pred_region
    _
  $region21: #{se_block.4} parent=0 // pred_fallthru
    _

// kernel: se_block.3
$region0: #{se_block.3}
  #allocation0 [shape = 'u32[]', space=smem, size = 0x4, offset = 0x4, fixed_abs, tag = 'smem constant byte address 0x4 - core index']
  #allocation1 [shape = 'u32[144,128]{1,0:T(1,128)}', space=vmem, size = 0x12000, scoped, tag = 'internal scratch']
  #allocation2 [shape = 'f32[1,128,1]{2,1,0:T(8,128)}', space=vmem, size = 0x10000, scoped, tag = 'scratch operand']
  %s0 = inlined_call_operand.vmem [shape: f32[2,128,256], index: 0, kind: input, shape index: {}]
  %s1 = inlined_call_operand.vmem [shape: f32[2,128,1], index: 1, kind: output, shape index: {}]
  %s2 = sld [smem:[#allocation0]]
  $region45: #{se_block.3} parent=0
    _
  %s4 = ssub.s32 1, %s2
  %s5 = scalar_select 0, %s4, %s2
  loop: start=0, step=1, limit=4
  $region2: #{se_block.3} parent=0 // loop_pre_header
    _
  $region3: #{se_block.3} parent=0 // loop_header
    %s7 = sphi 0, %s11
    %p8 = scmp.ge.s32.totalorder %s7, 4
    %s14 = sphi 0, %s26
    %s15 = sphi 0, %s22
    %s16 = sphi 0, %s14
    %s17 = sphi 0, %s15
    %s18 = sphi 0, %s16
    %s19 = sphi 0, %s17
    %s31 = sphi 0, %s33
    %s34 = sphi 0, %s31
    %s35 = sphi 0, %s34
    %s51 = sphi 0, %s35
    %s57 = sphi 0, %s59
    %s60 = sphi 0, %s57
    %s61 = sphi 0, %s60
    %s77 = sphi 0, %s61
  $region4: #{se_block.3} parent=0 // loop_header_branch
    %10 = sbr.rel (%p8) target = $region8
  $region5: #{se_block.3} parent=0 // loop_body
    %s12 = ssub.s32 %s7, 1
    %s13 = ssub.s32 %s7, 2
    %s20 = sadd.s32 1, %s15
    %p21 = scmp.ge.s32.totalorder %s20, 1
    %s22 = scalar_select %p21, 0, %s20
    %s23 = sadd.s32 1, %s14
    %s24 = scalar_select %p21, %s23, %s14
    %p25 = scmp.ge.s32.totalorder %s24, 2
    %s26 = scalar_select %p25, 0, %s24
    %s27 = ssub.s32 %s14, %s26
    %s28 = ssub.s32 %s15, %s22
    %s29 = sor.u32 %s27, %s28
    %p30 = scmp.eq.s32.totalorder %s29, 0
    %s32 = sadd.s32 %s31, 1
    %s33 = scalar_select %p30, %s31, %s32
    %p36 = pneg %p30
    %p37 = scmp.eq.s32.totalorder %s7, 1
    %p38 = por %p36, %p37
    %p39 = scmp.ne.s32.totalorder %s31, %s34
    %p40 = scmp.eq.s32.totalorder %s7, 0
    %p41 = por %p39, %p40
    %p42 = scmp.ne.s32.totalorder %s31, %s34
    %p43 = scmp.eq.s32.totalorder %s12, 1
    %p44 = por %p42, %p43
    %p45 = scmp.ne.s32.totalorder %s34, %s35
    %p46 = scmp.eq.s32.totalorder %s12, 0
    %p47 = por %p45, %p46
    %p48 = scmp.ne.s32.totalorder %s34, %s35
    %p49 = scmp.eq.s32.totalorder %s13, 1
    %p50 = por %p48, %p49
    %p52 = scmp.ne.s32.totalorder %s35, %s51
    %p53 = scmp.eq.s32.totalorder %s13, 0
    %p54 = por %p52, %p53
    %s55 = ssub.s32 %s14, %s26
    %p56 = scmp.eq.s32.totalorder %s55, 0
    %s58 = sadd.s32 %s57, 1
    %s59 = scalar_select %p56, %s57, %s58
    %p62 = pneg %p56
    %p63 = scmp.eq.s32.totalorder %s7, 1
    %p64 = por %p62, %p63
    %p65 = scmp.ne.s32.totalorder %s57, %s60
    %p66 = scmp.eq.s32.totalorder %s7, 0
    %p67 = por %p65, %p66
    %p68 = scmp.ne.s32.totalorder %s57, %s60
    %p69 = scmp.eq.s32.totalorder %s12, 1
    %p70 = por %p68, %p69
    %p71 = scmp.ne.s32.totalorder %s60, %s61
    %p72 = scmp.eq.s32.totalorder %s12, 0
    %p73 = por %p71, %p72
    %p74 = scmp.ne.s32.totalorder %s60, %s61
    %p75 = scmp.eq.s32.totalorder %s13, 1
    %p76 = por %p74, %p75
    %p78 = scmp.ne.s32.totalorder %s61, %s77
    %p79 = scmp.eq.s32.totalorder %s13, 0
    %p80 = por %p78, %p79
    %p81 = scmp.le.s32.totalorder 1, %s7
    %p82 = scmp.lt.s32.totalorder %s7, 3
    %p83 = pnand %p81, %p82
    %p84 = pneg %p83
    // Predicated region
    $region9: #{se_block.3} parent=5 // pred_check
      _
    $region10: #{se_block.3} parent=5 // pred_check_branch
      %86 = sbr.rel (%p83) target = $region12
    $region11: #{se_block.3} parent=5 // pred_region
      %s87 = ssub.s32 %s7, 1
    $region12: #{se_block.3} parent=5 // pred_fallthru
      _
    %p88 = scmp.lt.s32.totalorder %s7, 2
    // Predicated region
    $region13: #{se_block.3} parent=5 // pred_check
      %p89 = pneg %p88
    $region14: #{se_block.3} parent=5 // pred_check_branch
      %91 = sbr.rel (%p89) target = $region16
    $region15: #{se_block.3} parent=5 // pred_region
      // Predicated region
      $region17: #{se_block.3} parent=15 // pred_check
        %p92 = pneg %p41
      $region18: #{se_block.3} parent=15 // pred_check_branch
        %94 = sbr.rel (%p92) target = $region20
      $region19: #{se_block.3} parent=15 // pred_region
        %s95 = smul.u32 2, %s15
        %p96 = scmp.lt.s32.totalorder %s14, 1
        %s97 = scalar_select %p96, %s14, 1
        %p98 = scmp.lt.s32.totalorder %s95, 1
        %s99 = scalar_select %p98, %s95, 1
        %s100 = smul.addr %s97, 32
        %s101 = sadd.s32 %s99, %s100
        %s102 = smul.addr %s101, 8
        %s103 = scalar_lea.vmem %s0, %s102
        %s104 = smul.u32 2, %s15
      $region20: #{se_block.3} parent=15 // pred_fallthru
        _
    $region16: #{se_block.3} parent=5 // pred_fallthru
      _
    %p105 = scmp.le.s32.totalorder 1, %s7
    %p106 = scmp.lt.s32.totalorder %s7, 3
    %p107 = pnand %p105, %p106
    %p108 = pneg %p107
    // Predicated region
    $region21: #{se_block.3} parent=5 // pred_check
      _
    $region22: #{se_block.3} parent=5 // pred_check_branch
      %110 = sbr.rel (%p107) target = $region24
    $region23: #{se_block.3} parent=5 // pred_region
      %s111 = ssub.s32 %s7, 1
      %s112 = smul.u32 2, %s17
      %p113 = scmp.lt.s32.totalorder %s16, 1
      %s114 = scalar_select %p113, %s16, 1
      %p115 = scmp.lt.s32.totalorder %s112, 1
      %s116 = scalar_select %p115, %s112, 1
      %s117 = smul.addr %s114, 32
      %s118 = sadd.s32 %s116, %s117
      %s119 = smul.addr %s118, 8
      %s120 = scalar_lea.vmem %s0, %s119
      %p121 = pneg %p47
      %p122 = pneg %p44
      %p123 = pneg %p73
      %p124 = pneg %p70
      %p125 = scmp.lt.s32.totalorder %s16, 1
      %s126 = scalar_select %p125, %s16, 1
      %s127 = smul.addr %s126, 16
      %s128 = smul.addr %s127, 8
      %s129 = scalar_lea.vmem %s1, %s128
      %s130 = smul.u32 2, %s17
      %p131 = scmp.lt.s32.totalorder %s16, 1
      %s132 = scalar_select %p131, %s16, 1
      %p133 = scmp.lt.s32.totalorder %s130, 1
      %s134 = scalar_select %p133, %s130, 1
      %s135 = smul.addr %s132, 32
      %s136 = sadd.s32 %s134, %s135
      %s137 = smul.addr %s136, 8
      %s138 = scalar_lea.vmem %s0, %s137
      %s139 = smul.u32 2, %s17
      %p140 = scmp.lt.s32.totalorder %s16, 1
      %s141 = scalar_select %p140, %s16, 1
      %s142 = smul.addr %s141, 16
      %s143 = smul.addr %s142, 8
      %s144 = scalar_lea.vmem %s1, %s143
      %p145 = scmp.eq.s32.totalorder %s17, 0
      // Predicated region
      $region25: #{se_block.3} parent=23 // pred_check
        %p146 = pneg %p145
      $region26: #{se_block.3} parent=23 // pred_check_branch
        %148 = sbr.rel (%p146) target = $region28
      $region27: #{se_block.3} parent=23 // pred_region
        %vm149 = vcmask 7168
        %150 = vst.msk [vmem:[#allocation2] sm:$0xff] %vm149, 0.0
        %151 = vst.msk [vmem:[#allocation2 + $0x8] sm:$0xff] %vm149, 0.0
        %152 = vst.msk [vmem:[#allocation2 + $0x10] sm:$0xff] %vm149, 0.0
        %153 = vst.msk [vmem:[#allocation2 + $0x18] sm:$0xff] %vm149, 0.0
        %154 = vst.msk [vmem:[#allocation2 + $0x20] sm:$0xff] %vm149, 0.0
        %155 = vst.msk [vmem:[#allocation2 + $0x28] sm:$0xff] %vm149, 0.0
        %156 = vst.msk [vmem:[#allocation2 + $0x30] sm:$0xff] %vm149, 0.0
        %157 = vst.msk [vmem:[#allocation2 + $0x38] sm:$0xff] %vm149, 0.0
        %158 = vst.msk [vmem:[#allocation2 + $0x40] sm:$0xff] %vm149, 0.0
        %159 = vst.msk [vmem:[#allocation2 + $0x48] sm:$0xff] %vm149, 0.0
        %160 = vst.msk [vmem:[#allocation2 + $0x50] sm:$0xff] %vm149, 0.0
        %161 = vst.msk [vmem:[#allocation2 + $0x58] sm:$0xff] %vm149, 0.0
        %162 = vst.msk [vmem:[#allocation2 + $0x60] sm:$0xff] %vm149, 0.0
        %163 = vst.msk [vmem:[#allocation2 + $0x68] sm:$0xff] %vm149, 0.0
        %164 = vst.msk [vmem:[#allocation2 + $0x70] sm:$0xff] %vm149, 0.0
        %165 = vst.msk [vmem:[#allocation2 + $0x78] sm:$0xff] %vm149, 0.0
      $region28: #{se_block.3} parent=23 // pred_fallthru
        _
      %v166 = vld [vmem:[#allocation2] sm:$0xff]
      %v167 = vld [vmem:[#allocation2 + $0x8] sm:$0xff]
      %v168 = vld [vmem:[#allocation2 + $0x10] sm:$0xff]
      %v169 = vld [vmem:[#allocation2 + $0x18] sm:$0xff]
      %v170 = vld [vmem:[#allocation2 + $0x20] sm:$0xff]
      %v171 = vld [vmem:[#allocation2 + $0x28] sm:$0xff]
      %v172 = vld [vmem:[#allocation2 + $0x30] sm:$0xff]
      %v173 = vld [vmem:[#allocation2 + $0x38] sm:$0xff]
      %v174 = vld [vmem:[#allocation2 + $0x40] sm:$0xff]
      %v175 = vld [vmem:[#allocation2 + $0x48] sm:$0xff]
      %v176 = vld [vmem:[#allocation2 + $0x50] sm:$0xff]
      %v177 = vld [vmem:[#allocation2 + $0x58] sm:$0xff]
      %v178 = vld [vmem:[#allocation2 + $0x60] sm:$0xff]
      %v179 = vld [vmem:[#allocation2 + $0x68] sm:$0xff]
      %v180 = vld [vmem:[#allocation2 + $0x70] sm:$0xff]
      %v181 = vld [vmem:[#allocation2 + $0x78] sm:$0xff]
      %v182 = vld [vmem:[%s138] sm:$0xff]
      %v183 = vld [vmem:[%s138 + $0x8] sm:$0xff]
      %v184 = vld [vmem:[%s138 + $0x10] sm:$0xff]
      %v185 = vld [vmem:[%s138 + $0x18] sm:$0xff]
      %v186 = vld [vmem:[%s138 + $0x20] sm:$0xff]
      %v187 = vld [vmem:[%s138 + $0x28] sm:$0xff]
      %v188 = vld [vmem:[%s138 + $0x30] sm:$0xff]
      %v189 = vld [vmem:[%s138 + $0x38] sm:$0xff]
      %v190 = vld [vmem:[%s138 + $0x40] sm:$0xff]
      %v191 = vld [vmem:[%s138 + $0x48] sm:$0xff]
      %v192 = vld [vmem:[%s138 + $0x50] sm:$0xff]
      %v193 = vld [vmem:[%s138 + $0x58] sm:$0xff]
      %v194 = vld [vmem:[%s138 + $0x60] sm:$0xff]
      %v195 = vld [vmem:[%s138 + $0x68] sm:$0xff]
      %v196 = vld [vmem:[%s138 + $0x70] sm:$0xff]
      %v197 = vld [vmem:[%s138 + $0x78] sm:$0xff]
      %v198 = vld [vmem:[%s138 + $0x80] sm:$0xff]
      %v199 = vld [vmem:[%s138 + $0x88] sm:$0xff]
      %v200 = vld [vmem:[%s138 + $0x90] sm:$0xff]
      %v201 = vld [vmem:[%s138 + $0x98] sm:$0xff]
      %v202 = vld [vmem:[%s138 + $0xa0] sm:$0xff]
      %v203 = vld [vmem:[%s138 + $0xa8] sm:$0xff]
      %v204 = vld [vmem:[%s138 + $0xb0] sm:$0xff]
      %v205 = vld [vmem:[%s138 + $0xb8] sm:$0xff]
      %v206 = vld [vmem:[%s138 + $0xc0] sm:$0xff]
      %v207 = vld [vmem:[%s138 + $0xc8] sm:$0xff]
      %v208 = vld [vmem:[%s138 + $0xd0] sm:$0xff]
      %v209 = vld [vmem:[%s138 + $0xd8] sm:$0xff]
      %v210 = vld [vmem:[%s138 + $0xe0] sm:$0xff]
      %v211 = vld [vmem:[%s138 + $0xe8] sm:$0xff]
      %v212 = vld [vmem:[%s138 + $0xf0] sm:$0xff]
      %v213 = vld [vmem:[%s138 + $0xf8] sm:$0xff]
      %v214 = vadd.f32 %v182, %v183
      %215 = vadd.xlane.f32.xlu0 %v214
      %v216 = vpop.xlane.xlu0 %215
      %v217 = vadd.f32 %v184, %v185
      %218 = vadd.xlane.f32.xlu0 %v217
      %v219 = vpop.xlane.xlu0 %218
      %v220 = vadd.f32 %v186, %v187
      %221 = vadd.xlane.f32.xlu0 %v220
      %v222 = vpop.xlane.xlu0 %221
      %v223 = vadd.f32 %v188, %v189
      %224 = vadd.xlane.f32.xlu0 %v223
      %v225 = vpop.xlane.xlu0 %224
      %v226 = vadd.f32 %v190, %v191
      %227 = vadd.xlane.f32.xlu0 %v226
      %v228 = vpop.xlane.xlu0 %227
      %v229 = vadd.f32 %v192, %v193
      %230 = vadd.xlane.f32.xlu0 %v229
      %v231 = vpop.xlane.xlu0 %230
      %v232 = vadd.f32 %v194, %v195
      %233 = vadd.xlane.f32.xlu0 %v232
      %v234 = vpop.xlane.xlu0 %233
      %v235 = vadd.f32 %v196, %v197
      %236 = vadd.xlane.f32.xlu0 %v235
      %v237 = vpop.xlane.xlu0 %236
      %v238 = vadd.f32 %v198, %v199
      %239 = vadd.xlane.f32.xlu0 %v238
      %v240 = vpop.xlane.xlu0 %239
      %v241 = vadd.f32 %v200, %v201
      %242 = vadd.xlane.f32.xlu0 %v241
      %v243 = vpop.xlane.xlu0 %242
      %v244 = vadd.f32 %v202, %v203
      %245 = vadd.xlane.f32.xlu0 %v244
      %v246 = vpop.xlane.xlu0 %245
      %v247 = vadd.f32 %v204, %v205
      %248 = vadd.xlane.f32.xlu0 %v247
      %v249 = vpop.xlane.xlu0 %248
      %v250 = vadd.f32 %v206, %v207
      %251 = vadd.xlane.f32.xlu0 %v250
      %v252 = vpop.xlane.xlu0 %251
      %v253 = vadd.f32 %v208, %v209
      %254 = vadd.xlane.f32.xlu0 %v253
      %v255 = vpop.xlane.xlu0 %254
      %v256 = vadd.f32 %v210, %v211
      %257 = vadd.xlane.f32.xlu0 %v256
      %v258 = vpop.xlane.xlu0 %257
      %v259 = vadd.f32 %v212, %v213
      %260 = vadd.xlane.f32.xlu0 %v259
      %v261 = vpop.xlane.xlu0 %260
      %v262 = vadd.f32 %v166, %v216
      %v263 = vadd.f32 %v167, %v219
      %v264 = vadd.f32 %v168, %v222
      %v265 = vadd.f32 %v169, %v225
      %v266 = vadd.f32 %v170, %v228
      %v267 = vadd.f32 %v171, %v231
      %v268 = vadd.f32 %v172, %v234
      %v269 = vadd.f32 %v173, %v237
      %v270 = vadd.f32 %v174, %v240
      %v271 = vadd.f32 %v175, %v243
      %v272 = vadd.f32 %v176, %v246
      %v273 = vadd.f32 %v177, %v249
      %v274 = vadd.f32 %v178, %v252
      %v275 = vadd.f32 %v179, %v255
      %v276 = vadd.f32 %v180, %v258
      %v277 = vadd.f32 %v181, %v261
      %vm278 = vcmask 7168
      %279 = vst.msk [vmem:[#allocation2] sm:$0xff] %vm278, %v262
      %280 = vst.msk [vmem:[#allocation2 + $0x8] sm:$0xff] %vm278, %v263
      %281 = vst.msk [vmem:[#allocation2 + $0x10] sm:$0xff] %vm278, %v264
      %282 = vst.msk [vmem:[#allocation2 + $0x18] sm:$0xff] %vm278, %v265
      %283 = vst.msk [vmem:[#allocation2 + $0x20] sm:$0xff] %vm278, %v266
      %284 = vst.msk [vmem:[#allocation2 + $0x28] sm:$0xff] %vm278, %v267
      %285 = vst.msk [vmem:[#allocation2 + $0x30] sm:$0xff] %vm278, %v268
      %286 = vst.msk [vmem:[#allocation2 + $0x38] sm:$0xff] %vm278, %v269
      %287 = vst.msk [vmem:[#allocation2 + $0x40] sm:$0xff] %vm278, %v270
      %288 = vst.msk [vmem:[#allocation2 + $0x48] sm:$0xff] %vm278, %v271
      %289 = vst.msk [vmem:[#allocation2 + $0x50] sm:$0xff] %vm278, %v272
      %290 = vst.msk [vmem:[#allocation2 + $0x58] sm:$0xff] %vm278, %v273
      %291 = vst.msk [vmem:[#allocation2 + $0x60] sm:$0xff] %vm278, %v274
      %292 = vst.msk [vmem:[#allocation2 + $0x68] sm:$0xff] %vm278, %v275
      %293 = vst.msk [vmem:[#allocation2 + $0x70] sm:$0xff] %vm278, %v276
      %294 = vst.msk [vmem:[#allocation2 + $0x78] sm:$0xff] %vm278, %v277
      // Predicated region
      $region29: #{se_block.3} parent=23 // pred_check
        %p295 = pneg %p145
      $region30: #{se_block.3} parent=23 // pred_check_branch
        %297 = sbr.rel (%p295) target = $region32
      $region31: #{se_block.3} parent=23 // pred_region
        %v298 = vld [vmem:[#allocation2] sm:$0xff]
        %v299 = vld [vmem:[#allocation2 + $0x8] sm:$0xff]
        %v300 = vld [vmem:[#allocation2 + $0x10] sm:$0xff]
        %v301 = vld [vmem:[#allocation2 + $0x18] sm:$0xff]
        %v302 = vld [vmem:[#allocation2 + $0x20] sm:$0xff]
        %v303 = vld [vmem:[#allocation2 + $0x28] sm:$0xff]
        %v304 = vld [vmem:[#allocation2 + $0x30] sm:$0xff]
        %v305 = vld [vmem:[#allocation2 + $0x38] sm:$0xff]
        %v306 = vld [vmem:[#allocation2 + $0x40] sm:$0xff]
        %v307 = vld [vmem:[#allocation2 + $0x48] sm:$0xff]
        %v308 = vld [vmem:[#allocation2 + $0x50] sm:$0xff]
        %v309 = vld [vmem:[#allocation2 + $0x58] sm:$0xff]
        %v310 = vld [vmem:[#allocation2 + $0x60] sm:$0xff]
        %v311 = vld [vmem:[#allocation2 + $0x68] sm:$0xff]
        %v312 = vld [vmem:[#allocation2 + $0x70] sm:$0xff]
        %v313 = vld [vmem:[#allocation2 + $0x78] sm:$0xff]
        %314 = vst.msk [vmem:[%s144] sm:$0xff] %vm278, %v298
        %315 = vst.msk [vmem:[%s144 + $0x8] sm:$0xff] %vm278, %v299
        %316 = vst.msk [vmem:[%s144 + $0x10] sm:$0xff] %vm278, %v300
        %317 = vst.msk [vmem:[%s144 + $0x18] sm:$0xff] %vm278, %v301
        %318 = vst.msk [vmem:[%s144 + $0x20] sm:$0xff] %vm278, %v302
        %319 = vst.msk [vmem:[%s144 + $0x28] sm:$0xff] %vm278, %v303
        %320 = vst.msk [vmem:[%s144 + $0x30] sm:$0xff] %vm278, %v304
        %321 = vst.msk [vmem:[%s144 + $0x38] sm:$0xff] %vm278, %v305
        %322 = vst.msk [vmem:[%s144 + $0x40] sm:$0xff] %vm278, %v306
        %323 = vst.msk [vmem:[%s144 + $0x48] sm:$0xff] %vm278, %v307
        %324 = vst.msk [vmem:[%s144 + $0x50] sm:$0xff] %vm278, %v308
        %325 = vst.msk [vmem:[%s144 + $0x58] sm:$0xff] %vm278, %v309
        %326 = vst.msk [vmem:[%s144 + $0x60] sm:$0xff] %vm278, %v310
        %327 = vst.msk [vmem:[%s144 + $0x68] sm:$0xff] %vm278, %v311
        %328 = vst.msk [vmem:[%s144 + $0x70] sm:$0xff] %vm278, %v312
        %329 = vst.msk [vmem:[%s144 + $0x78] sm:$0xff] %vm278, %v313
      $region32: #{se_block.3} parent=23 // pred_fallthru
        _
      %p330 = scmp.lt.s32.totalorder %s16, 1
      %s331 = scalar_select %p330, %s16, 1
      %s332 = smul.addr %s331, 16
      %s333 = smul.addr %s332, 8
      %s334 = scalar_lea.vmem %s1, %s333
      // Predicated region
      $region33: #{se_block.3} parent=23 // pred_check
        %p335 = pneg %p70
      $region34: #{se_block.3} parent=23 // pred_check_branch
        %337 = sbr.rel (%p335) target = $region36
      $region35: #{se_block.3} parent=23 // pred_region
        _
      $region36: #{se_block.3} parent=23 // pred_fallthru
        _
    $region24: #{se_block.3} parent=5 // pred_fallthru
      _
    %p338 = scmp.le.s32.totalorder 2, %s7
    // Predicated region
    $region37: #{se_block.3} parent=5 // pred_check
      %p339 = pneg %p338
    $region38: #{se_block.3} parent=5 // pred_check_branch
      %341 = sbr.rel (%p339) target = $region40
    $region39: #{se_block.3} parent=5 // pred_region
      %s342 = ssub.s32 %s7, 2
      // Predicated region
      $region41: #{se_block.3} parent=39 // pred_check
        %p343 = pneg %p76
      $region42: #{se_block.3} parent=39 // pred_check_branch
        %345 = sbr.rel (%p343) target = $region44
      $region43: #{se_block.3} parent=39 // pred_region
        %p346 = scmp.lt.s32.totalorder %s18, 1
        %s347 = scalar_select %p346, %s18, 1
        %s348 = smul.addr %s347, 16
        %s349 = smul.addr %s348, 8
        %s350 = scalar_lea.vmem %s1, %s349
      $region44: #{se_block.3} parent=39 // pred_fallthru
        _
    $region40: #{se_block.3} parent=5 // pred_fallthru
      _
  $region6: #{se_block.3} parent=0 // loop_footer
    %s11 = sadd.s32 1, %s7
  $region7: #{se_block.3} parent=0 // loop_footer_branch
    %6 = sbr.rel target = $region3
  $region8: #{se_block.3} parent=0 // loop_exit
    _

// kernel: se_block.5
$region0: #{se_block.5}
  #allocation0 [shape = 'u32[]', space=smem, size = 0x4, offset = 0x4, fixed_abs, tag = 'smem constant byte address 0x4 - core index']
  #allocation1 [shape = 'u32[144,128]{1,0:T(1,128)}', space=vmem, size = 0x12000, scoped, tag = 'internal scratch']
  %s0 = inlined_call_operand.vmem [shape: f32[2,128,256], index: 0, kind: input, shape index: {}]
  %s1 = inlined_call_operand.vmem [shape: f32[2,128,1], index: 1, kind: input, shape index: {}]
  %s2 = inlined_call_operand.vmem [shape: f32[2,128,256], index: 2, kind: output, shape index: {}]
  %s3 = sld [smem:[#allocation0]]
  $region41: #{se_block.5} parent=0
    _
  %s5 = ssub.s32 1, %s3
  %s6 = scalar_select 0, %s5, %s3
  loop: start=0, step=1, limit=4
  $region2: #{se_block.5} parent=0 // loop_pre_header
    _
  $region3: #{se_block.5} parent=0 // loop_header
    %s8 = sphi 0, %s12
    %p9 = scmp.ge.s32.totalorder %s8, 4
    %s15 = sphi 0, %s27
    %s16 = sphi 0, %s23
    %s17 = sphi 0, %s15
    %s18 = sphi 0, %s16
    %s19 = sphi 0, %s17
    %s20 = sphi 0, %s18
    %s32 = sphi 0, %s34
    %s35 = sphi 0, %s32
    %s36 = sphi 0, %s35
    %s52 = sphi 0, %s36
    %s58 = sphi 0, %s60
    %s61 = sphi 0, %s58
    %s62 = sphi 0, %s61
    %s78 = sphi 0, %s62
    %s86 = sphi 0, %s88
    %s89 = sphi 0, %s86
    %s90 = sphi 0, %s89
    %s106 = sphi 0, %s90
  $region4: #{se_block.5} parent=0 // loop_header_branch
    %11 = sbr.rel (%p9) target = $region8
  $region5: #{se_block.5} parent=0 // loop_body
    %s13 = ssub.s32 %s8, 1
    %s14 = ssub.s32 %s8, 2
    %s21 = sadd.s32 1, %s16
    %p22 = scmp.ge.s32.totalorder %s21, 1
    %s23 = scalar_select %p22, 0, %s21
    %s24 = sadd.s32 1, %s15
    %s25 = scalar_select %p22, %s24, %s15
    %p26 = scmp.ge.s32.totalorder %s25, 2
    %s27 = scalar_select %p26, 0, %s25
    %s28 = ssub.s32 %s15, %s27
    %s29 = ssub.s32 %s16, %s23
    %s30 = sor.u32 %s28, %s29
    %p31 = scmp.eq.s32.totalorder %s30, 0
    %s33 = sadd.s32 %s32, 1
    %s34 = scalar_select %p31, %s32, %s33
    %p37 = pneg %p31
    %p38 = scmp.eq.s32.totalorder %s8, 1
    %p39 = por %p37, %p38
    %p40 = scmp.ne.s32.totalorder %s32, %s35
    %p41 = scmp.eq.s32.totalorder %s8, 0
    %p42 = por %p40, %p41
    %p43 = scmp.ne.s32.totalorder %s32, %s35
    %p44 = scmp.eq.s32.totalorder %s13, 1
    %p45 = por %p43, %p44
    %p46 = scmp.ne.s32.totalorder %s35, %s36
    %p47 = scmp.eq.s32.totalorder %s13, 0
    %p48 = por %p46, %p47
    %p49 = scmp.ne.s32.totalorder %s35, %s36
    %p50 = scmp.eq.s32.totalorder %s14, 1
    %p51 = por %p49, %p50
    %p53 = scmp.ne.s32.totalorder %s36, %s52
    %p54 = scmp.eq.s32.totalorder %s14, 0
    %p55 = por %p53, %p54
    %s56 = ssub.s32 %s15, %s27
    %p57 = scmp.eq.s32.totalorder %s56, 0
    %s59 = sadd.s32 %s58, 1
    %s60 = scalar_select %p57, %s58, %s59
    %p63 = pneg %p57
    %p64 = scmp.eq.s32.totalorder %s8, 1
    %p65 = por %p63, %p64
    %p66 = scmp.ne.s32.totalorder %s58, %s61
    %p67 = scmp.eq.s32.totalorder %s8, 0
    %p68 = por %p66, %p67
    %p69 = scmp.ne.s32.totalorder %s58, %s61
    %p70 = scmp.eq.s32.totalorder %s13, 1
    %p71 = por %p69, %p70
    %p72 = scmp.ne.s32.totalorder %s61, %s62
    %p73 = scmp.eq.s32.totalorder %s13, 0
    %p74 = por %p72, %p73
    %p75 = scmp.ne.s32.totalorder %s61, %s62
    %p76 = scmp.eq.s32.totalorder %s14, 1
    %p77 = por %p75, %p76
    %p79 = scmp.ne.s32.totalorder %s62, %s78
    %p80 = scmp.eq.s32.totalorder %s14, 0
    %p81 = por %p79, %p80
    %s82 = ssub.s32 %s15, %s27
    %s83 = ssub.s32 %s16, %s23
    %s84 = sor.u32 %s82, %s83
    %p85 = scmp.eq.s32.totalorder %s84, 0
    %s87 = sadd.s32 %s86, 1
    %s88 = scalar_select %p85, %s86, %s87
    %p91 = pneg %p85
    %p92 = scmp.eq.s32.totalorder %s8, 1
    %p93 = por %p91, %p92
    %p94 = scmp.ne.s32.totalorder %s86, %s89
    %p95 = scmp.eq.s32.totalorder %s8, 0
    %p96 = por %p94, %p95
    %p97 = scmp.ne.s32.totalorder %s86, %s89
    %p98 = scmp.eq.s32.totalorder %s13, 1
    %p99 = por %p97, %p98
    %p100 = scmp.ne.s32.totalorder %s89, %s90
    %p101 = scmp.eq.s32.totalorder %s13, 0
    %p102 = por %p100, %p101
    %p103 = scmp.ne.s32.totalorder %s89, %s90
    %p104 = scmp.eq.s32.totalorder %s14, 1
    %p105 = por %p103, %p104
    %p107 = scmp.ne.s32.totalorder %s90, %s106
    %p108 = scmp.eq.s32.totalorder %s14, 0
    %p109 = por %p107, %p108
    %p110 = scmp.le.s32.totalorder 1, %s8
    %p111 = scmp.lt.s32.totalorder %s8, 3
    %p112 = pnand %p110, %p111
    %p113 = pneg %p112
    // Predicated region
    $region9: #{se_block.5} parent=5 // pred_check
      _
    $region10: #{se_block.5} parent=5 // pred_check_branch
      %115 = sbr.rel (%p112) target = $region12
    $region11: #{se_block.5} parent=5 // pred_region
      %s116 = ssub.s32 %s8, 1
    $region12: #{se_block.5} parent=5 // pred_fallthru
      _
    %p117 = scmp.lt.s32.totalorder %s8, 2
    // Predicated region
    $region13: #{se_block.5} parent=5 // pred_check
      %p118 = pneg %p117
    $region14: #{se_block.5} parent=5 // pred_check_branch
      %120 = sbr.rel (%p118) target = $region16
    $region15: #{se_block.5} parent=5 // pred_region
      // Predicated region
      $region17: #{se_block.5} parent=15 // pred_check
        %p121 = pneg %p42
      $region18: #{se_block.5} parent=15 // pred_check_branch
        %123 = sbr.rel (%p121) target = $region20
      $region19: #{se_block.5} parent=15 // pred_region
        %s124 = smul.u32 2, %s16
        %p125 = scmp.lt.s32.totalorder %s15, 1
        %s126 = scalar_select %p125, %s15, 1
        %p127 = scmp.lt.s32.totalorder %s124, 1
        %s128 = scalar_select %p127, %s124, 1
        %s129 = smul.addr %s126, 32
        %s130 = sadd.s32 %s128, %s129
        %s131 = smul.addr %s130, 8
        %s132 = scalar_lea.vmem %s0, %s131
        %s133 = smul.u32 2, %s16
      $region20: #{se_block.5} parent=15 // pred_fallthru
        _
      // Predicated region
      $region21: #{se_block.5} parent=15 // pred_check
        %p134 = pneg %p68
      $region22: #{se_block.5} parent=15 // pred_check_branch
        %136 = sbr.rel (%p134) target = $region24
      $region23: #{se_block.5} parent=15 // pred_region
        %p137 = scmp.lt.s32.totalorder %s15, 1
        %s138 = scalar_select %p137, %s15, 1
        %s139 = smul.addr %s138, 16
        %s140 = smul.addr %s139, 8
        %s141 = scalar_lea.vmem %s1, %s140
      $region24: #{se_block.5} parent=15 // pred_fallthru
        _
    $region16: #{se_block.5} parent=5 // pred_fallthru
      _
    %p142 = scmp.le.s32.totalorder 1, %s8
    %p143 = scmp.lt.s32.totalorder %s8, 3
    %p144 = pnand %p142, %p143
    %p145 = pneg %p144
    // Predicated region
    $region25: #{se_block.5} parent=5 // pred_check
      _
    $region26: #{se_block.5} parent=5 // pred_check_branch
      %147 = sbr.rel (%p144) target = $region28
    $region27: #{se_block.5} parent=5 // pred_region
      %s148 = ssub.s32 %s8, 1
      %s149 = smul.u32 2, %s18
      %p150 = scmp.lt.s32.totalorder %s17, 1
      %s151 = scalar_select %p150, %s17, 1
      %p152 = scmp.lt.s32.totalorder %s149, 1
      %s153 = scalar_select %p152, %s149, 1
      %s154 = smul.addr %s151, 32
      %s155 = sadd.s32 %s153, %s154
      %s156 = smul.addr %s155, 8
      %s157 = scalar_lea.vmem %s0, %s156
      %p158 = pneg %p48
      %p159 = pneg %p45
      %p160 = scmp.lt.s32.totalorder %s17, 1
      %s161 = scalar_select %p160, %s17, 1
      %s162 = smul.addr %s161, 16
      %s163 = smul.addr %s162, 8
      %s164 = scalar_lea.vmem %s1, %s163
      %p165 = pneg %p74
      %p166 = pneg %p71
      %p167 = pneg %p102
      %p168 = pneg %p99
      %s169 = smul.u32 2, %s18
      %p170 = scmp.lt.s32.totalorder %s17, 1
      %s171 = scalar_select %p170, %s17, 1
      %p172 = scmp.lt.s32.totalorder %s169, 1
      %s173 = scalar_select %p172, %s169, 1
      %s174 = smul.addr %s171, 32
      %s175 = sadd.s32 %s173, %s174
      %s176 = smul.addr %s175, 8
      %s177 = scalar_lea.vmem %s2, %s176
      %s178 = smul.u32 2, %s18
      %p179 = scmp.lt.s32.totalorder %s17, 1
      %s180 = scalar_select %p179, %s17, 1
      %p181 = scmp.lt.s32.totalorder %s178, 1
      %s182 = scalar_select %p181, %s178, 1
      %s183 = smul.addr %s180, 32
      %s184 = sadd.s32 %s182, %s183
      %s185 = smul.addr %s184, 8
      %s186 = scalar_lea.vmem %s0, %s185
      %s187 = smul.u32 2, %s18
      %p188 = scmp.lt.s32.totalorder %s17, 1
      %s189 = scalar_select %p188, %s17, 1
      %s190 = smul.addr %s189, 16
      %s191 = smul.addr %s190, 8
      %s192 = scalar_lea.vmem %s1, %s191
      %s193 = smul.u32 2, %s18
      %p194 = scmp.lt.s32.totalorder %s17, 1
      %s195 = scalar_select %p194, %s17, 1
      %p196 = scmp.lt.s32.totalorder %s193, 1
      %s197 = scalar_select %p196, %s193, 1
      %s198 = smul.addr %s195, 32
      %s199 = sadd.s32 %s197, %s198
      %s200 = smul.addr %s199, 8
      %s201 = scalar_lea.vmem %s2, %s200
      %s202 = smul.u32 2, %s18
      %v203 = vld [vmem:[%s186] sm:$0xff]
      %v204 = vld [vmem:[%s186 + $0x8] sm:$0xff]
      %v205 = vld [vmem:[%s186 + $0x10] sm:$0xff]
      %v206 = vld [vmem:[%s186 + $0x18] sm:$0xff]
      %v207 = vld [vmem:[%s186 + $0x20] sm:$0xff]
      %v208 = vld [vmem:[%s186 + $0x28] sm:$0xff]
      %v209 = vld [vmem:[%s186 + $0x30] sm:$0xff]
      %v210 = vld [vmem:[%s186 + $0x38] sm:$0xff]
      %v211 = vld [vmem:[%s186 + $0x40] sm:$0xff]
      %v212 = vld [vmem:[%s186 + $0x48] sm:$0xff]
      %v213 = vld [vmem:[%s186 + $0x50] sm:$0xff]
      %v214 = vld [vmem:[%s186 + $0x58] sm:$0xff]
      %v215 = vld [vmem:[%s186 + $0x60] sm:$0xff]
      %v216 = vld [vmem:[%s186 + $0x68] sm:$0xff]
      %v217 = vld [vmem:[%s186 + $0x70] sm:$0xff]
      %v218 = vld [vmem:[%s186 + $0x78] sm:$0xff]
      %v219 = vld [vmem:[%s186 + $0x80] sm:$0xff]
      %v220 = vld [vmem:[%s186 + $0x88] sm:$0xff]
      %v221 = vld [vmem:[%s186 + $0x90] sm:$0xff]
      %v222 = vld [vmem:[%s186 + $0x98] sm:$0xff]
      %v223 = vld [vmem:[%s186 + $0xa0] sm:$0xff]
      %v224 = vld [vmem:[%s186 + $0xa8] sm:$0xff]
      %v225 = vld [vmem:[%s186 + $0xb0] sm:$0xff]
      %v226 = vld [vmem:[%s186 + $0xb8] sm:$0xff]
      %v227 = vld [vmem:[%s186 + $0xc0] sm:$0xff]
      %v228 = vld [vmem:[%s186 + $0xc8] sm:$0xff]
      %v229 = vld [vmem:[%s186 + $0xd0] sm:$0xff]
      %v230 = vld [vmem:[%s186 + $0xd8] sm:$0xff]
      %v231 = vld [vmem:[%s186 + $0xe0] sm:$0xff]
      %v232 = vld [vmem:[%s186 + $0xe8] sm:$0xff]
      %v233 = vld [vmem:[%s186 + $0xf0] sm:$0xff]
      %v234 = vld [vmem:[%s186 + $0xf8] sm:$0xff]
      %v235 = vld [vmem:[%s192] sm:$0xff]
      %v236 = vld [vmem:[%s192 + $0x8] sm:$0xff]
      %v237 = vld [vmem:[%s192 + $0x10] sm:$0xff]
      %v238 = vld [vmem:[%s192 + $0x18] sm:$0xff]
      %v239 = vld [vmem:[%s192 + $0x20] sm:$0xff]
      %v240 = vld [vmem:[%s192 + $0x28] sm:$0xff]
      %v241 = vld [vmem:[%s192 + $0x30] sm:$0xff]
      %v242 = vld [vmem:[%s192 + $0x38] sm:$0xff]
      %v243 = vld [vmem:[%s192 + $0x40] sm:$0xff]
      %v244 = vld [vmem:[%s192 + $0x48] sm:$0xff]
      %v245 = vld [vmem:[%s192 + $0x50] sm:$0xff]
      %v246 = vld [vmem:[%s192 + $0x58] sm:$0xff]
      %v247 = vld [vmem:[%s192 + $0x60] sm:$0xff]
      %v248 = vld [vmem:[%s192 + $0x68] sm:$0xff]
      %v249 = vld [vmem:[%s192 + $0x70] sm:$0xff]
      %v250 = vld [vmem:[%s192 + $0x78] sm:$0xff]
      %252 = vset.pattern.permute.xlu0 0
      %253 = vperm.xlu0 %252, %v235
      %v254 = vpop.permute.xlu0 %253
      %257 = vset.pattern.permute.xlu0 0
      %258 = vperm.xlu0 %257, %v236
      %v259 = vpop.permute.xlu0 %258
      %262 = vset.pattern.permute.xlu0 0
      %263 = vperm.xlu0 %262, %v237
      %v264 = vpop.permute.xlu0 %263
      %267 = vset.pattern.permute.xlu0 0
      %268 = vperm.xlu0 %267, %v238
      %v269 = vpop.permute.xlu0 %268
      %272 = vset.pattern.permute.xlu0 0
      %273 = vperm.xlu0 %272, %v239
      %v274 = vpop.permute.xlu0 %273
      %277 = vset.pattern.permute.xlu0 0
      %278 = vperm.xlu0 %277, %v240
      %v279 = vpop.permute.xlu0 %278
      %282 = vset.pattern.permute.xlu0 0
      %283 = vperm.xlu0 %282, %v241
      %v284 = vpop.permute.xlu0 %283
      %287 = vset.pattern.permute.xlu0 0
      %288 = vperm.xlu0 %287, %v242
      %v289 = vpop.permute.xlu0 %288
      %292 = vset.pattern.permute.xlu0 0
      %293 = vperm.xlu0 %292, %v243
      %v294 = vpop.permute.xlu0 %293
      %297 = vset.pattern.permute.xlu0 0
      %298 = vperm.xlu0 %297, %v244
      %v299 = vpop.permute.xlu0 %298
      %302 = vset.pattern.permute.xlu0 0
      %303 = vperm.xlu0 %302, %v245
      %v304 = vpop.permute.xlu0 %303
      %307 = vset.pattern.permute.xlu0 0
      %308 = vperm.xlu0 %307, %v246
      %v309 = vpop.permute.xlu0 %308
      %312 = vset.pattern.permute.xlu0 0
      %313 = vperm.xlu0 %312, %v247
      %v314 = vpop.permute.xlu0 %313
      %317 = vset.pattern.permute.xlu0 0
      %318 = vperm.xlu0 %317, %v248
      %v319 = vpop.permute.xlu0 %318
      %322 = vset.pattern.permute.xlu0 0
      %323 = vperm.xlu0 %322, %v249
      %v324 = vpop.permute.xlu0 %323
      %327 = vset.pattern.permute.xlu0 0
      %328 = vperm.xlu0 %327, %v250
      %v329 = vpop.permute.xlu0 %328
      %v331 = vmul.f32 %v203, %v254
      %v332 = vmul.f32 %v204, %v254
      %v333 = vmul.f32 %v205, %v259
      %v334 = vmul.f32 %v206, %v259
      %v335 = vmul.f32 %v207, %v264
      %v336 = vmul.f32 %v208, %v264
      %v337 = vmul.f32 %v209, %v269
      %v338 = vmul.f32 %v210, %v269
      %v339 = vmul.f32 %v211, %v274
      %v340 = vmul.f32 %v212, %v274
      %v341 = vmul.f32 %v213, %v279
      %v342 = vmul.f32 %v214, %v279
      %v343 = vmul.f32 %v215, %v284
      %v344 = vmul.f32 %v216, %v284
      %v345 = vmul.f32 %v217, %v289
      %v346 = vmul.f32 %v218, %v289
      %v347 = vmul.f32 %v219, %v294
      %v348 = vmul.f32 %v220, %v294
      %v349 = vmul.f32 %v221, %v299
      %v350 = vmul.f32 %v222, %v299
      %v351 = vmul.f32 %v223, %v304
      %v352 = vmul.f32 %v224, %v304
      %v353 = vmul.f32 %v225, %v309
      %v354 = vmul.f32 %v226, %v309
      %v355 = vmul.f32 %v227, %v314
      %v356 = vmul.f32 %v228, %v314
      %v357 = vmul.f32 %v229, %v319
      %v358 = vmul.f32 %v230, %v319
      %v359 = vmul.f32 %v231, %v324
      %v360 = vmul.f32 %v232, %v324
      %v361 = vmul.f32 %v233, %v329
      %v362 = vmul.f32 %v234, %v329
      %363 = vst [vmem:[%s201] sm:$0xff] %v331
      %364 = vst [vmem:[%s201 + $0x8] sm:$0xff] %v332
      %365 = vst [vmem:[%s201 + $0x10] sm:$0xff] %v333
      %366 = vst [vmem:[%s201 + $0x18] sm:$0xff] %v334
      %367 = vst [vmem:[%s201 + $0x20] sm:$0xff] %v335
      %368 = vst [vmem:[%s201 + $0x28] sm:$0xff] %v336
      %369 = vst [vmem:[%s201 + $0x30] sm:$0xff] %v337
      %370 = vst [vmem:[%s201 + $0x38] sm:$0xff] %v338
      %371 = vst [vmem:[%s201 + $0x40] sm:$0xff] %v339
      %372 = vst [vmem:[%s201 + $0x48] sm:$0xff] %v340
      %373 = vst [vmem:[%s201 + $0x50] sm:$0xff] %v341
      %374 = vst [vmem:[%s201 + $0x58] sm:$0xff] %v342
      %375 = vst [vmem:[%s201 + $0x60] sm:$0xff] %v343
      %376 = vst [vmem:[%s201 + $0x68] sm:$0xff] %v344
      %377 = vst [vmem:[%s201 + $0x70] sm:$0xff] %v345
      %378 = vst [vmem:[%s201 + $0x78] sm:$0xff] %v346
      %379 = vst [vmem:[%s201 + $0x80] sm:$0xff] %v347
      %380 = vst [vmem:[%s201 + $0x88] sm:$0xff] %v348
      %381 = vst [vmem:[%s201 + $0x90] sm:$0xff] %v349
      %382 = vst [vmem:[%s201 + $0x98] sm:$0xff] %v350
      %383 = vst [vmem:[%s201 + $0xa0] sm:$0xff] %v351
      %384 = vst [vmem:[%s201 + $0xa8] sm:$0xff] %v352
      %385 = vst [vmem:[%s201 + $0xb0] sm:$0xff] %v353
      %386 = vst [vmem:[%s201 + $0xb8] sm:$0xff] %v354
      %387 = vst [vmem:[%s201 + $0xc0] sm:$0xff] %v355
      %388 = vst [vmem:[%s201 + $0xc8] sm:$0xff] %v356
      %389 = vst [vmem:[%s201 + $0xd0] sm:$0xff] %v357
      %390 = vst [vmem:[%s201 + $0xd8] sm:$0xff] %v358
      %391 = vst [vmem:[%s201 + $0xe0] sm:$0xff] %v359
      %392 = vst [vmem:[%s201 + $0xe8] sm:$0xff] %v360
      %393 = vst [vmem:[%s201 + $0xf0] sm:$0xff] %v361
      %394 = vst [vmem:[%s201 + $0xf8] sm:$0xff] %v362
      %s395 = smul.u32 2, %s18
      %p396 = scmp.lt.s32.totalorder %s17, 1
      %s397 = scalar_select %p396, %s17, 1
      %p398 = scmp.lt.s32.totalorder %s395, 1
      %s399 = scalar_select %p398, %s395, 1
      %s400 = smul.addr %s397, 32
      %s401 = sadd.s32 %s399, %s400
      %s402 = smul.addr %s401, 8
      %s403 = scalar_lea.vmem %s2, %s402
      // Predicated region
      $region29: #{se_block.5} parent=27 // pred_check
        %p404 = pneg %p99
      $region30: #{se_block.5} parent=27 // pred_check_branch
        %406 = sbr.rel (%p404) target = $region32
      $region31: #{se_block.5} parent=27 // pred_region
        %s407 = smul.u32 2, %s18
      $region32: #{se_block.5} parent=27 // pred_fallthru
        _
    $region28: #{se_block.5} parent=5 // pred_fallthru
      _
    %p408 = scmp.le.s32.totalorder 2, %s8
    // Predicated region
    $region33: #{se_block.5} parent=5 // pred_check
      %p409 = pneg %p408
    $region34: #{se_block.5} parent=5 // pred_check_branch
      %411 = sbr.rel (%p409) target = $region36
    $region35: #{se_block.5} parent=5 // pred_region
      %s412 = ssub.s32 %s8, 2
      // Predicated region
      $region37: #{se_block.5} parent=35 // pred_check
        %p413 = pneg %p105
      $region38: #{se_block.5} parent=35 // pred_check_branch
        %415 = sbr.rel (%p413) target = $region40
      $region39: #{se_block.5} parent=35 // pred_region
        %s416 = smul.u32 2, %s20
        %p417 = scmp.lt.s32.totalorder %s19, 1
        %s418 = scalar_select %p417, %s19, 1
        %p419 = scmp.lt.s32.totalorder %s416, 1
        %s420 = scalar_select %p419, %s416, 1
        %s421 = smul.addr %s418, 32
        %s422 = sadd.s32 %s420, %s421
        %s423 = smul.addr %s422, 8
        %s424 = scalar_lea.vmem %s2, %s423
      $region40: #{se_block.5} parent=35 // pred_fallthru
        _
    $region36: #{se_block.5} parent=5 // pred_fallthru
      _
  $region6: #{se_block.5} parent=0 // loop_footer
    %s12 = sadd.s32 1, %s8
  $region7: #{se_block.5} parent=0 // loop_footer_branch
    %7 = sbr.rel target = $region3
  $region8: #{se_block.5} parent=0 // loop_exit
    _

</llo_original>
